<compile_context>
chip_gen: v6e
topology: v6e:2x2x1
jax: 0.10.0
libtpu: 0.0.40
codegen_flags: <defaults>
</compile_context>

<pallas_src>
import jax
import jax.numpy as jnp
from jax.experimental import pallas as pl
from jax.experimental.pallas import tpu as pltpu

_LANES = 128
_SUBLANES = 8
_NUM_PARTS = 2      # leading "parallel" grid axis (v7x megacore; no-op on 1-TC chips)


def _sublane_pack(itemsize: int) -> int:
    """Packed sublane granule for the input dtype."""
    if itemsize >= 4:
        return 8
    if itemsize == 2:
        return 16
    return 32


def _target_tile_rows(itemsize: int) -> int:
    # ~2 MiB per input block; 2 inputs x 2 pipeline buffers ~= 8 MiB of VMEM:
    # under v5e's 16 MiB default scoped limit and well under v6e/v7x's 32 MiB,
    # while amortizing per-grid-step overhead.
    if itemsize >= 4:
        return 4096
    return 8192


def _make_bce_kernel(valid_rows: int, tile_rows: int, steps_total: int,
                     needs_mask: bool):
    """Kernel factory; all arguments are static per call."""

    def kernel(x_ref, t_ref, o_ref):
        i = pl.program_id(1)

        # o_ref is this part's resident (8, 128) accumulator block.
        @pl.when(i == 0)
        def _():
            o_ref[...] = jnp.zeros_like(o_ref)

        x = x_ref[...].astype(jnp.float32)
        t = t_ref[...].astype(jnp.float32)

        # PyTorch's F.binary_cross_entropy clamps the log terms at -100 so
        # that 0 * log(0) contributes 0 instead of NaN.
        log_x = jnp.maximum(jnp.log(x), -100.0)
        log_1mx = jnp.maximum(jnp.log(1.0 - x), -100.0)
        # -(t*log_x + (1-t)*log_1mx) == t*(log_1mx - log_x) - log_1mx
        loss = t * (log_1mx - log_x) - log_1mx

        def fold(v):
            # (tile_rows, 128) -> (8, 128) with pure VPU vreg adds.
            return v.reshape(tile_rows // _SUBLANES, _SUBLANES, _LANES).sum(axis=0)

        if not needs_mask:
            # Statically known: every block is full and unique -> hot path only.
            o_ref[...] += fold(loss)
        else:
            block_id = pl.program_id(0) * pl.num_programs(1) + i
            is_interior = block_id < steps_total - 1

            @pl.when(is_interior)
            def _():
                # Hot path: full, in-range block -> no per-element masking.
                o_ref[...] += fold(loss)

            @pl.when(jnp.logical_not(is_interior))
            def _():
                # Cold path (at most one partial tail block plus clamped
                # redundant blocks): loop-invariant iota vs. scalar row bound.
                # NOTE: must stay a select (jnp.where), not a multiplicative
                # mask -- out-of-range lanes may hold NaN/-inf from log().
                bound = valid_rows - block_id * tile_rows     # scalar, may be <= 0
                row_in_tile = jax.lax.broadcasted_iota(
                    jnp.int32, (tile_rows, _LANES), 0)
                o_ref[...] += fold(jnp.where(row_in_tile < bound, loss, 0.0))

    return kernel


def bce_loss(inputs: jax.Array, targets: jax.Array, *, tile_rows=None) -> jax.Array:
    """Mean binary cross entropy over all elements (matches F.binary_cross_entropy)."""
    x = inputs.reshape(-1)
    t = targets.reshape(-1)
    n = int(x.shape[0])

    itemsize = jnp.dtype(x.dtype).itemsize
    sub = _sublane_pack(itemsize)
    target = _target_tile_rows(itemsize)

    rows_lane = -(-n // _LANES)
    pad_to = _LANES
    if rows_lane <= target and rows_lane % sub != 0:
        # Tiny inputs: round the row count up to the packed-sublane granule so
        # the single full-array block keeps the (rows//8, 8, 128) fold valid
        # and respects the packed (16,128)/(32,128) min tile for narrow dtypes.
        pad_to = sub * _LANES
    pad = (-n) % pad_to
    if pad:
        # Padding with (x=1, t=1) contributes exactly 0 loss.  Only taken when
        # n is not lane-aligned (or the input is tiny), so the implied copy is
        # cheap; lane-aligned sizes are fed with zero extra HBM traffic.
        # TODO(synk): a 1-D BlockSpec + in-kernel reshape (or manual DMA via
        # memory_space=pl.ANY) would make the ragged tail fully zero-copy.
        x = jnp.concatenate([x, jnp.ones((pad,), x.dtype)])
        t = jnp.concatenate([t, jnp.ones((pad,), t.dtype)])

    rows = (n + pad) // _LANES
    x2 = x.reshape(rows, _LANES)          # free reshape (no copy)
    t2 = t.reshape(rows, _LANES)

    if tile_rows is None:
        tile_rows = target
    tile_rows = min(tile_rows, rows)      # full-array dim allowed if rows < tile
    assert tile_rows % _SUBLANES == 0, tile_rows

    steps_total = pl.cdiv(rows, tile_rows)
    num_parts = min(_NUM_PARTS, steps_total)
    steps_per_part = pl.cdiv(steps_total, num_parts)
    needs_mask = (rows % tile_rows != 0) or (num_parts * steps_per_part != steps_total)

    def in_map(c, i):
        # Clamp so trailing (redundant) steps re-read the last valid block;
        # their contribution is zeroed in the kernel's cold masked path.
        return (jnp.minimum(c * steps_per_part + i, steps_total - 1), 0)

    cost = pl.CostEstimate(
        flops=6 * n,
        transcendentals=2 * n,
        bytes_accessed=2 * (n + pad) * itemsize
        + num_parts * _SUBLANES * _LANES * 4,
    )

    partials = pl.pallas_call(
        _make_bce_kernel(rows, tile_rows, steps_total, needs_mask),
        out_shape=jax.ShapeDtypeStruct((num_parts, _SUBLANES, _LANES), jnp.float32),
        grid_spec=pltpu.PrefetchScalarGridSpec(
            num_scalar_prefetch=0,
            grid=(num_parts, steps_per_part),
            in_specs=[
                pl.BlockSpec((tile_rows, _LANES), in_map),
                pl.BlockSpec((tile_rows, _LANES), in_map),
            ],
            out_specs=pl.BlockSpec((None, _SUBLANES, _LANES), lambda c, i: (c, 0, 0)),
        ),
        compiler_params=pltpu.CompilerParams(
            dimension_semantics=("parallel", "arbitrary"),
        ),
        cost_estimate=cost,
    )(x2, t2)

    return (jnp.sum(partials) / jnp.float32(n)).astype(jnp.float32)


def _bce_ref(inputs, targets):
    x = inputs.reshape(-1).astype(jnp.float32)
    t = targets.reshape(-1).astype(jnp.float32)
    log_x = jnp.maximum(jnp.log(x), -100.0)
    log_1mx = jnp.maximum(jnp.log(1.0 - x), -100.0)
    return jnp.mean(-(t * log_x + (1.0 - t) * log_1mx))


if __name__ == "__main__":
    key = jax.random.PRNGKey(0)
    k1, k2, k3, k4 = jax.random.split(key, 4)

    # NCHW inputs, same convention as the PyTorch module (probabilities in (0,1)).
    shape = (2, 4, 16, 16)
    inputs = jax.nn.sigmoid(jax.random.normal(k1, shape, dtype=jnp.float32))
    targets = (jax.random.uniform(k2, shape) > 0.5).astype(jnp.float32)

    out = jax.block_until_ready(bce_loss(inputs, targets))
    ref = _bce_ref(inputs, targets)
    assert jnp.allclose(out, ref, rtol=1e-5, atol=1e-6), (out, ref)

    # Sanity-check the cold path (masked partial tail + clamped redundant block
    # + 2-part split) with a small tile override: 72 rows of 128 lanes, 16-row
    # tiles -> 5 real blocks across a (2, 3) grid.
    shape2 = (6, 12, 128)
    inputs2 = jax.nn.sigmoid(jax.random.normal(k3, shape2, dtype=jnp.float32))
    targets2 = (jax.random.uniform(k4, shape2) > 0.5).astype(jnp.float32)
    out2 = jax.block_until_ready(bce_loss(inputs2, targets2, tile_rows=16))
    ref2 = _bce_ref(inputs2, targets2)
    assert jnp.allclose(out2, ref2, rtol=1e-4, atol=1e-5), (out2, ref2)

    print("KERNEL_OK")
</pallas_src>

<mosaic_0001>
module attributes {stable_mosaic.version = 11 : i64} {
  func.func @kernel(%arg0: i32, %arg1: i32, %arg2: memref<16x128xf32, #tpu.memory_space<vmem>>, %arg3: memref<16x128xf32, #tpu.memory_space<vmem>>, %arg4: memref<1x8x128xf32, #tpu.memory_space<vmem>>) attributes {dimension_semantics = [#tpu.dimension_semantics<parallel>, #tpu.dimension_semantics<arbitrary>], iteration_bounds = array<i64: 1, 1>, scalar_prefetch = 0 : i64, scratch_operands = 0 : i64, tpu.core_type = #tpu.core_type<tc>, window_params = [{transform_indices = @transform_0, window_bounds = array<i64: 16, 128>}, {transform_indices = @transform_1, window_bounds = array<i64: 16, 128>}, {transform_indices = @transform_2, window_bounds = array<i64: 1, 8, 128>}]} {
    %c0_i32 = arith.constant 0 : i32
    %0 = arith.cmpi eq, %arg1, %c0_i32 : i32
    %1 = arith.extui %0 : i1 to i32
    %c0_i32_0 = arith.constant 0 : i32
    %2 = arith.cmpi ne, %1, %c0_i32_0 : i32
    scf.if %2 {
      %cst_13 = arith.constant 0.000000e+00 : f32
      %24 = vector.broadcast %cst_13 : f32 to vector<8x128xf32>
      %c0_14 = arith.constant 0 : index
      %c0_15 = arith.constant 0 : index
      %c0_16 = arith.constant 0 : index
      %25 = vector.load %arg4[%c0_14, %c0_15, %c0_16] : memref<1x8x128xf32, #tpu.memory_space<vmem>>, vector<1x8x128xf32>
      %26 = vector.shape_cast %25 : vector<1x8x128xf32> to vector<8x128xf32>
      %27 = vector.shape_cast %24 : vector<8x128xf32> to vector<1x8x128xf32>
      tpu.vector_store %arg4[%c0_14, %c0_15, %c0_16], %27 {strides = array<i32>} : memref<1x8x128xf32, #tpu.memory_space<vmem>>, vector<1x8x128xf32>,
    } else {
    }
    %c0 = arith.constant 0 : index
    %c0_1 = arith.constant 0 : index
    %3 = vector.load %arg2[%c0, %c0_1] : memref<16x128xf32, #tpu.memory_space<vmem>>, vector<16x128xf32>
    %c0_2 = arith.constant 0 : index
    %c0_3 = arith.constant 0 : index
    %4 = vector.load %arg3[%c0_2, %c0_3] : memref<16x128xf32, #tpu.memory_space<vmem>>, vector<16x128xf32>
    %5 = math.log %3 : vector<16x128xf32>
    %cst = arith.constant -1.000000e+02 : f32
    %6 = vector.broadcast %cst : f32 to vector<16x128xf32>
    %7 = arith.maximumf %5, %6 : vector<16x128xf32>
    %cst_4 = arith.constant 1.000000e+00 : f32
    %8 = vector.broadcast %cst_4 : f32 to vector<16x128xf32>
    %9 = arith.subf %8, %3 : vector<16x128xf32>
    %10 = math.log %9 : vector<16x128xf32>
    %cst_5 = arith.constant -1.000000e+02 : f32
    %11 = vector.broadcast %cst_5 : f32 to vector<16x128xf32>
    %12 = arith.maximumf %10, %11 : vector<16x128xf32>
    %13 = arith.subf %12, %7 : vector<16x128xf32>
    %14 = arith.mulf %4, %13 : vector<16x128xf32>
    %15 = arith.subf %14, %12 : vector<16x128xf32>
    %c0_6 = arith.constant 0 : index
    %c0_7 = arith.constant 0 : index
    %c0_8 = arith.constant 0 : index
    %16 = vector.load %arg4[%c0_6, %c0_7, %c0_8] : memref<1x8x128xf32, #tpu.memory_space<vmem>>, vector<1x8x128xf32>
    %17 = vector.shape_cast %16 : vector<1x8x128xf32> to vector<8x128xf32>
    %18 = vector.shape_cast %15 : vector<16x128xf32> to vector<2x8x128xf32>
    %cst_9 = arith.constant dense<0.000000e+00> : vector<8x128xf32>
    %19 = vector.multi_reduction <add>, %18, %cst_9 [0] : vector<2x8x128xf32> to vector<8x128xf32>
    %20 = arith.addf %17, %19 : vector<8x128xf32>
    %c0_10 = arith.constant 0 : index
    %c0_11 = arith.constant 0 : index
    %c0_12 = arith.constant 0 : index
    %21 = vector.load %arg4[%c0_10, %c0_11, %c0_12] : memref<1x8x128xf32, #tpu.memory_space<vmem>>, vector<1x8x128xf32>
    %22 = vector.shape_cast %21 : vector<1x8x128xf32> to vector<8x128xf32>
    %23 = vector.shape_cast %20 : vector<8x128xf32> to vector<1x8x128xf32>
    tpu.vector_store %arg4[%c0_10, %c0_11, %c0_12], %23 {strides = array<i32>} : memref<1x8x128xf32, #tpu.memory_space<vmem>>, vector<1x8x128xf32>,
    return
  }
  func.func @transform_0(%arg0: i32, %arg1: i32) -> (i32, i32) {
    %c1_i32 = arith.constant 1 : i32
    %0 = arith.muli %arg0, %c1_i32 : i32
    %1 = arith.addi %0, %arg1 : i32
    %c0_i32 = arith.constant 0 : i32
    %2 = arith.minsi %1, %c0_i32 : i32
    %c0_i32_0 = arith.constant 0 : i32
    %c0_i32_1 = arith.constant 0 : i32
    return %2, %c0_i32_0 : i32, i32
  }
  func.func @transform_1(%arg0: i32, %arg1: i32) -> (i32, i32) {
    %c1_i32 = arith.constant 1 : i32
    %0 = arith.muli %arg0, %c1_i32 : i32
    %1 = arith.addi %0, %arg1 : i32
    %c0_i32 = arith.constant 0 : i32
    %2 = arith.minsi %1, %c0_i32 : i32
    %c0_i32_0 = arith.constant 0 : i32
    %c0_i32_1 = arith.constant 0 : i32
    return %2, %c0_i32_0 : i32, i32
  }
  func.func @transform_2(%arg0: i32, %arg1: i32) -> (i32, i32, i32) {
    %c0_i32 = arith.constant 0 : i32
    %c0_i32_0 = arith.constant 0 : i32
    %c0_i32_1 = arith.constant 0 : i32
    return %arg0, %c0_i32, %c0_i32_0 : i32, i32, i32
  }
}

</mosaic_0001>

<llo_original>
// kernel: tpu_custom_call.1
$region0: #{tpu_custom_call.1}
  #allocation0 [shape = 'u32[]', space=smem, size = 0x4, offset = 0x4, fixed_abs, tag = 'smem constant byte address 0x4 - core index']
  #allocation1 [shape = 'u32[144,128]{1,0:T(1,128)}', space=vmem, size = 0x12000, scoped, tag = 'internal scratch']
  %s0 = inlined_call_operand.hbm [shape: f32[16,128], index: 0, kind: input, shape index: {}]
  %s1 = inlined_call_operand.hbm [shape: f32[16,128], index: 1, kind: input, shape index: {}]
  %s2 = inlined_call_operand.hbm [shape: f32[1,8,128], index: 2, kind: output, shape index: {}]
  %s3 = sld [smem:[#allocation0]]
  $region30: #{tpu_custom_call.1} parent=0
    _
  %s5 = ssub.s32 1, %s3
  %s6 = scalar_select 0, %s5, %s3
  $region1: #{tpu_custom_call.1} parent=0
    #allocation2 [shape = 'u8[8192]{0}', space=vmem, size = 0x2000, scoped, tag = 'input window, operand 0, single buffered']
    #allocation3 [shape = 's32[1]{0}', space=sflag, size = 0x4, scoped, tag = 'scoped memory for tpu_custom_call.1']
    #allocation4 [shape = 's32[1]{0}', space=sflag, size = 0x4, scoped, tag = 'scoped memory for tpu_custom_call.1']
    #allocation5 [shape = 'u8[8192]{0}', space=vmem, size = 0x2000, scoped, tag = 'input window, operand 1, single buffered']
    #allocation6 [shape = 's32[1]{0}', space=sflag, size = 0x4, scoped, tag = 'scoped memory for tpu_custom_call.1']
    #allocation7 [shape = 'u8[4096]{0}', space=vmem, size = 0x1000, scoped, tag = 'output window, operand 0, single buffered']
    %7 = vsyncpa [#allocation3], 0
    %8 = vsyncpa [#allocation6], 0
    %9 = vsyncpa [#allocation4], 0
    // Predicated region
    $region2: #{tpu_custom_call.1} parent=1 // pred_check
      _
    $region3: #{tpu_custom_call.1} parent=1 // pred_check_branch
      %11 = sbr.rel (0) target = $region5
    $region4: #{tpu_custom_call.1} parent=1 // pred_region
      %s12 = sadd.s32 0, 0
      %p13 = scmp.lt.s32.totalorder %s12, 0
      %s14 = scalar_select %p13, %s12, 0
      %s15 = smul.u32 2, %s14
      %s17 = ssub.s32 256, 256
      %18 = vsyncadd [#allocation3], %s17
      %s19 = smul.addr %s15, 128
      %s20 = scalar_lea.hbm %s0, %s19
      %s21 = sshll.u32 [#allocation2], 4
      %s22 = int_to_ptr.vmem [resolvable:$true] %s21
      %27 = dma.hbm_to_vmem [thread:$0]  %s20, 256, %s22, [#allocation3], 128, 128, 8
    $region5: #{tpu_custom_call.1} parent=1 // pred_fallthru
      _
    // Predicated region
    $region6: #{tpu_custom_call.1} parent=1 // pred_check
      _
    $region7: #{tpu_custom_call.1} parent=1 // pred_check_branch
      %29 = sbr.rel (0) target = $region9
    $region8: #{tpu_custom_call.1} parent=1 // pred_region
      %s30 = sadd.s32 0, 0
      %p31 = scmp.lt.s32.totalorder %s30, 0
      %s32 = scalar_select %p31, %s30, 0
      %s33 = smul.u32 2, %s32
      %s35 = ssub.s32 256, 256
      %36 = vsyncadd [#allocation6], %s35
      %s37 = smul.addr %s33, 128
      %s38 = scalar_lea.hbm %s1, %s37
      %s39 = sshll.u32 [#allocation5], 4
      %s40 = int_to_ptr.vmem [resolvable:$true] %s39
      %45 = dma.hbm_to_vmem [thread:$0]  %s38, 256, %s40, [#allocation6], 128, 128, 8
    $region9: #{tpu_custom_call.1} parent=1 // pred_fallthru
      _
    // Predicated region
    $region10: #{tpu_custom_call.1} parent=1 // pred_check
      _
    $region11: #{tpu_custom_call.1} parent=1 // pred_check_branch
      %47 = sbr.rel (0) target = $region13
    $region12: #{tpu_custom_call.1} parent=1 // pred_region
      %48 = dma.done [#allocation3], 256
    $region13: #{tpu_custom_call.1} parent=1 // pred_fallthru
      _
    // Predicated region
    $region14: #{tpu_custom_call.1} parent=1 // pred_check
      _
    $region15: #{tpu_custom_call.1} parent=1 // pred_check_branch
      %50 = sbr.rel (0) target = $region17
    $region16: #{tpu_custom_call.1} parent=1 // pred_region
      %51 = dma.done [#allocation6], 256
    $region17: #{tpu_custom_call.1} parent=1 // pred_fallthru
      _
    %s52 = sadd.s32 0, 0
    %p53 = scmp.lt.s32.totalorder %s52, 0
    %s54 = scalar_select %p53, %s52, 0
    %s55 = smul.u32 2, %s54
    %s56 = sadd.s32 0, 0
    %p57 = scmp.lt.s32.totalorder %s56, 0
    %s58 = scalar_select %p57, %s56, 0
    %s59 = smul.u32 2, %s58
    %p60 = scmp.eq.s32.totalorder 0, 0
    // Predicated region
    $region18: #{tpu_custom_call.1} parent=1 // pred_check
      %p61 = pneg %p60
    $region19: #{tpu_custom_call.1} parent=1 // pred_check_branch
      %63 = sbr.rel (%p61) target = $region21
    $region20: #{tpu_custom_call.1} parent=1 // pred_region
      %64 = vst [vmem:[#allocation7] sm:$0xff] 0.0
    $region21: #{tpu_custom_call.1} parent=1 // pred_fallthru
      _
    %v65 = vld [vmem:[#allocation2] sm:$0xff]
    %v66 = vld [vmem:[#allocation2 + $0x8] sm:$0xff]
    %v67 = vld [vmem:[#allocation5] sm:$0xff]
    %v68 = vld [vmem:[#allocation5 + $0x8] sm:$0xff]
    %v69 = vlog2.pop %v65
    %v70 = vmul.f32 %v69, 0.6931472
    %v71 = vlog2.pop %v66
    %v72 = vmul.f32 %v71, 0.6931472
    %v73 = vmax.f32 %v70, -100.0
    %v74 = vmax.f32 %v72, -100.0
    %v75 = vsub.f32 1.0, %v65
    %v76 = vsub.f32 1.0, %v66
    %v77 = vlog2.pop %v75
    %v78 = vmul.f32 %v77, 0.6931472
    %v79 = vlog2.pop %v76
    %v80 = vmul.f32 %v79, 0.6931472
    %v81 = vmax.f32 %v78, -100.0
    %v82 = vmax.f32 %v80, -100.0
    %v83 = vsub.f32 %v81, %v73
    %v84 = vsub.f32 %v82, %v74
    %v85 = vmul.f32 %v67, %v83
    %v86 = vmul.f32 %v68, %v84
    %v87 = vsub.f32 %v85, %v81
    %v88 = vsub.f32 %v86, %v82
    %v89 = vld [vmem:[#allocation7] sm:$0xff]
    %v90 = vadd.f32 %v87, %v88
    %v91 = vadd.f32 %v89, %v90
    %92 = vst [vmem:[#allocation7] sm:$0xff] %v91
    // Predicated region
    $region22: #{tpu_custom_call.1} parent=1 // pred_check
      _
    $region23: #{tpu_custom_call.1} parent=1 // pred_check_branch
      %94 = sbr.rel (0) target = $region25
    $region24: #{tpu_custom_call.1} parent=1 // pred_region
      %s96 = ssub.s32 128, 128
      %97 = vsyncadd [#allocation4], %s96
      %s99 = sshll.u32 [#allocation7], 4
      %s100 = int_to_ptr.vmem [resolvable:$true] %s99
      %102 = dma.vmem_to_hbm [thread:$0]  %s100, 128, %s2, [#allocation4]
    $region25: #{tpu_custom_call.1} parent=1 // pred_fallthru
      _
    // Predicated region
    $region26: #{tpu_custom_call.1} parent=1 // pred_check
      _
    $region27: #{tpu_custom_call.1} parent=1 // pred_check_branch
      %104 = sbr.rel (0) target = $region29
    $region28: #{tpu_custom_call.1} parent=1 // pred_region
      %105 = dma.done [#allocation4], 128
    $region29: #{tpu_custom_call.1} parent=1 // pred_fallthru
      _
    %106 = vsyncpa [#allocation3], 1
    %107 = vsyncpa [#allocation6], 1
    %108 = vsyncpa [#allocation4], 1

</llo_original>
